<compile_context>
chip_gen: v7x
topology: tpu7x:2x2x1
jax: 0.10.0
libtpu: 0.0.40
codegen_flags: <defaults>
</compile_context>

<pallas_src>
import jax
import jax.numpy as jnp
from jax.experimental import pallas as pl
from jax.experimental.pallas import tpu as pltpu


def depthwise_dilation(x, weights, se_h=3, se_w=3, *,
                       channel_block=None,
                       vmem_budget_bytes=16 * 1024 * 1024):
    """x: (B, C, H, W), weights: (C, se_h*se_w). Returns (B, C, H, W)."""
    B, C, H, W = x.shape
    kk = se_h * se_w
    assert weights.shape == (C, kk)
    # The PyTorch layer indexes taps with (row=i//se_h, col=i%se_h); combined
    # with padding (se_h//2, se_w//2) this is only self-consistent for square
    # structuring elements. Guard it here rather than silently going OOB.
    assert se_h == se_w, "DepthwiseDilationLayer tap indexing requires se_h == se_w"
    ph, pw = se_h // 2, se_w // 2
    Hp, Wp = H + 2 * ph, W + 2 * pw
    itemsize = jnp.dtype(x.dtype).itemsize

    # ---- channel tiling (review item 3): size the per-step block against a
    # VMEM budget (double-buffered in + out, padded scratch, tiny weights).
    if channel_block is None:
        def _block_bytes(ct):
            return (4 * ct * H * W + ct * Hp * Wp + 2 * kk * ct) * itemsize
        channel_block = C
        while channel_block > 1 and _block_bytes(channel_block) > vmem_budget_bytes:
            channel_block //= 2
    channel_block = max(1, min(int(channel_block), C))
    while C % channel_block:          # snap to a divisor of C
        channel_block -= 1
    Ct = channel_block

    # Weights as a broadcast-friendly VMEM operand: w_op[i, c, 0, 0] = weights[c, i].
    w_op = jnp.transpose(weights).reshape(kk, C, 1, 1).astype(x.dtype)

    def kernel(x_ref, w_ref, o_ref, pad_ref):
        # x_ref:   VMEM (1, Ct, H, W)   -- unpadded, W-aligned input block
        # w_ref:   VMEM (kk, Ct, 1, 1)  -- per-channel SE weights
        # o_ref:   VMEM (1, Ct, H, W)
        # pad_ref: VMEM (Ct, Hp, Wp)    -- zero-padded scratch (conv2d border)
        pad_ref[...] = jnp.zeros_like(pad_ref)
        pad_ref[:, ph:ph + H, pw:pw + W] = x_ref[0]

        acc = None
        for kh in range(se_w):            # row offset = i // se_h
            # One (Ct, H, Wp) load per vertical offset; the se_h column shifts
            # come from slicing the in-register value, not from re-loading.
            slab = pad_ref[:, kh:kh + H, :]
            for kw in range(se_h):        # col offset = i % se_h
                i = kh * se_h + kw
                tap = slab[:, :, kw:kw + W] + w_ref[i]     # (Ct,H,W) + (Ct,1,1)
                acc = tap if acc is None else jnp.maximum(acc, tap)
        o_ref[0] = acc.astype(o_ref.dtype)                 # single store / step

    return pl.pallas_call(
        kernel,
        out_shape=jax.ShapeDtypeStruct((B, C, H, W), x.dtype),
        grid=(B, C // Ct),
        in_specs=[
            pl.BlockSpec((1, Ct, H, W), lambda b, cb: (b, cb, 0, 0)),
            pl.BlockSpec((kk, Ct, 1, 1), lambda b, cb: (0, cb, 0, 0)),
        ],
        out_specs=pl.BlockSpec((1, Ct, H, W), lambda b, cb: (b, cb, 0, 0)),
        scratch_shapes=[pltpu.VMEM((Ct, Hp, Wp), x.dtype)],
        compiler_params=pltpu.CompilerParams(
            dimension_semantics=("parallel", "parallel"),
            vmem_limit_bytes=32 * 1024 * 1024,
        ),
    )(x, w_op)


def reference(x, weights, se_h=3, se_w=3):
    """Pure-JAX reference matching the PyTorch forward exactly."""
    B, C, H, W = x.shape
    ph, pw = se_h // 2, se_w // 2
    xp = jnp.pad(x, ((0, 0), (0, 0), (ph, ph), (pw, pw)))
    stacks = []
    for i in range(se_h * se_w):
        kh, kw = i // se_h, i % se_h
        stacks.append(xp[:, :, kh:kh + H, kw:kw + W]
                      + weights[:, i][None, :, None, None])
    return jnp.max(jnp.stack(stacks, axis=2), axis=2)


if __name__ == "__main__":
    B, C, H, W = 2, 4, 16, 16
    se_h, se_w = 3, 3

    key = jax.random.PRNGKey(0)
    k_x, k_w = jax.random.split(key)
    x = jax.random.normal(k_x, (B, C, H, W), dtype=jnp.float32)
    # Matches torch.rand(1, C, se_h*se_w, 1, 1) - 1.0 (squeezed to (C, kk)).
    weights = jax.random.uniform(k_w, (C, se_h * se_w), dtype=jnp.float32) - 1.0

    out = depthwise_dilation(x, weights, se_h, se_w)
    out = jax.block_until_ready(out)

    ref = reference(x, weights, se_h, se_w)
    assert out.shape == (B, C, H, W)
    assert jnp.allclose(out, ref, atol=1e-6, rtol=1e-6)

    print("KERNEL_OK")
</pallas_src>

<mosaic_0001>
module attributes {stable_mosaic.version = 11 : i64} {
  func.func @kernel(%arg0: i32, %arg1: i32, %arg2: memref<1x4x16x16xf32, #tpu.memory_space<vmem>>, %arg3: memref<9x4x1x1xf32, #tpu.memory_space<vmem>>, %arg4: memref<1x4x16x16xf32, #tpu.memory_space<vmem>>, %arg5: memref<4x18x18xf32, #tpu.memory_space<vmem>>) attributes {dimension_semantics = [#tpu.dimension_semantics<parallel>, #tpu.dimension_semantics<parallel>], iteration_bounds = array<i64: 2, 1>, scalar_prefetch = 0 : i64, scratch_operands = 1 : i64, tpu.core_type = #tpu.core_type<tc>, window_params = [{transform_indices = @transform_0, window_bounds = array<i64: 1, 4, 16, 16>}, {transform_indices = @transform_1, window_bounds = array<i64: 9, 4, 1, 1>}, {transform_indices = @transform_2, window_bounds = array<i64: 1, 4, 16, 16>}]} {
    %cst = arith.constant 0.000000e+00 : f32
    %0 = vector.broadcast %cst : f32 to vector<4x18x18xf32>
    %c0 = arith.constant 0 : index
    %c0_0 = arith.constant 0 : index
    %c0_1 = arith.constant 0 : index
    %1 = vector.load %arg5[%c0, %c0_0, %c0_1] : memref<4x18x18xf32, #tpu.memory_space<vmem>>, vector<4x18x18xf32>
    tpu.vector_store %arg5[%c0, %c0_0, %c0_1], %0 {strides = array<i32>} : memref<4x18x18xf32, #tpu.memory_space<vmem>>, vector<4x18x18xf32>,
    %c0_2 = arith.constant 0 : index
    %c0_3 = arith.constant 0 : index
    %c0_4 = arith.constant 0 : index
    %c0_5 = arith.constant 0 : index
    %2 = vector.load %arg2[%c0_2, %c0_3, %c0_4, %c0_5] : memref<1x4x16x16xf32, #tpu.memory_space<vmem>>, vector<1x4x16x16xf32>
    %3 = vector.shape_cast %2 : vector<1x4x16x16xf32> to vector<4x16x16xf32>
    %c0_6 = arith.constant 0 : index
    %c1 = arith.constant 1 : index
    %c1_7 = arith.constant 1 : index
    %4 = vector.load %arg5[%c0_6, %c1, %c1_7] : memref<4x18x18xf32, #tpu.memory_space<vmem>>, vector<4x16x16xf32>
    tpu.vector_store %arg5[%c0_6, %c1, %c1_7], %3 {strides = array<i32>} : memref<4x18x18xf32, #tpu.memory_space<vmem>>, vector<4x16x16xf32>,
    %c0_8 = arith.constant 0 : index
    %c0_9 = arith.constant 0 : index
    %c0_10 = arith.constant 0 : index
    %5 = vector.load %arg5[%c0_8, %c0_9, %c0_10] : memref<4x18x18xf32, #tpu.memory_space<vmem>>, vector<4x16x18xf32>
    %6 = vector.extract_strided_slice %5 {offsets = [0, 0, 0], sizes = [4, 16, 16], strides = [1, 1, 1]} : vector<4x16x18xf32> to vector<4x16x16xf32>
    %c0_11 = arith.constant 0 : index
    %c0_12 = arith.constant 0 : index
    %c0_13 = arith.constant 0 : index
    %c0_14 = arith.constant 0 : index
    %7 = vector.load %arg3[%c0_11, %c0_12, %c0_13, %c0_14] : memref<9x4x1x1xf32, #tpu.memory_space<vmem>>, vector<1x4x1x1xf32>
    %8 = vector.shape_cast %7 : vector<1x4x1x1xf32> to vector<4x1x1xf32>
    %9 = vector.broadcast %8 : vector<4x1x1xf32> to vector<4x16x16xf32>
    %10 = arith.addf %6, %9 : vector<4x16x16xf32>
    %11 = vector.extract_strided_slice %5 {offsets = [0, 0, 1], sizes = [4, 16, 16], strides = [1, 1, 1]} : vector<4x16x18xf32> to vector<4x16x16xf32>
    %c1_15 = arith.constant 1 : index
    %c0_16 = arith.constant 0 : index
    %c0_17 = arith.constant 0 : index
    %c0_18 = arith.constant 0 : index
    %12 = vector.load %arg3[%c1_15, %c0_16, %c0_17, %c0_18] : memref<9x4x1x1xf32, #tpu.memory_space<vmem>>, vector<1x4x1x1xf32>
    %13 = vector.shape_cast %12 : vector<1x4x1x1xf32> to vector<4x1x1xf32>
    %14 = vector.broadcast %13 : vector<4x1x1xf32> to vector<4x16x16xf32>
    %15 = arith.addf %11, %14 : vector<4x16x16xf32>
    %16 = arith.maximumf %10, %15 : vector<4x16x16xf32>
    %17 = vector.extract_strided_slice %5 {offsets = [0, 0, 2], sizes = [4, 16, 16], strides = [1, 1, 1]} : vector<4x16x18xf32> to vector<4x16x16xf32>
    %c2 = arith.constant 2 : index
    %c0_19 = arith.constant 0 : index
    %c0_20 = arith.constant 0 : index
    %c0_21 = arith.constant 0 : index
    %18 = vector.load %arg3[%c2, %c0_19, %c0_20, %c0_21] : memref<9x4x1x1xf32, #tpu.memory_space<vmem>>, vector<1x4x1x1xf32>
    %19 = vector.shape_cast %18 : vector<1x4x1x1xf32> to vector<4x1x1xf32>
    %20 = vector.broadcast %19 : vector<4x1x1xf32> to vector<4x16x16xf32>
    %21 = arith.addf %17, %20 : vector<4x16x16xf32>
    %22 = arith.maximumf %16, %21 : vector<4x16x16xf32>
    %c0_22 = arith.constant 0 : index
    %c1_23 = arith.constant 1 : index
    %c0_24 = arith.constant 0 : index
    %23 = vector.load %arg5[%c0_22, %c1_23, %c0_24] : memref<4x18x18xf32, #tpu.memory_space<vmem>>, vector<4x16x18xf32>
    %24 = vector.extract_strided_slice %23 {offsets = [0, 0, 0], sizes = [4, 16, 16], strides = [1, 1, 1]} : vector<4x16x18xf32> to vector<4x16x16xf32>
    %c3 = arith.constant 3 : index
    %c0_25 = arith.constant 0 : index
    %c0_26 = arith.constant 0 : index
    %c0_27 = arith.constant 0 : index
    %25 = vector.load %arg3[%c3, %c0_25, %c0_26, %c0_27] : memref<9x4x1x1xf32, #tpu.memory_space<vmem>>, vector<1x4x1x1xf32>
    %26 = vector.shape_cast %25 : vector<1x4x1x1xf32> to vector<4x1x1xf32>
    %27 = vector.broadcast %26 : vector<4x1x1xf32> to vector<4x16x16xf32>
    %28 = arith.addf %24, %27 : vector<4x16x16xf32>
    %29 = arith.maximumf %22, %28 : vector<4x16x16xf32>
    %30 = vector.extract_strided_slice %23 {offsets = [0, 0, 1], sizes = [4, 16, 16], strides = [1, 1, 1]} : vector<4x16x18xf32> to vector<4x16x16xf32>
    %c4 = arith.constant 4 : index
    %c0_28 = arith.constant 0 : index
    %c0_29 = arith.constant 0 : index
    %c0_30 = arith.constant 0 : index
    %31 = vector.load %arg3[%c4, %c0_28, %c0_29, %c0_30] : memref<9x4x1x1xf32, #tpu.memory_space<vmem>>, vector<1x4x1x1xf32>
    %32 = vector.shape_cast %31 : vector<1x4x1x1xf32> to vector<4x1x1xf32>
    %33 = vector.broadcast %32 : vector<4x1x1xf32> to vector<4x16x16xf32>
    %34 = arith.addf %30, %33 : vector<4x16x16xf32>
    %35 = arith.maximumf %29, %34 : vector<4x16x16xf32>
    %36 = vector.extract_strided_slice %23 {offsets = [0, 0, 2], sizes = [4, 16, 16], strides = [1, 1, 1]} : vector<4x16x18xf32> to vector<4x16x16xf32>
    %c5 = arith.constant 5 : index
    %c0_31 = arith.constant 0 : index
    %c0_32 = arith.constant 0 : index
    %c0_33 = arith.constant 0 : index
    %37 = vector.load %arg3[%c5, %c0_31, %c0_32, %c0_33] : memref<9x4x1x1xf32, #tpu.memory_space<vmem>>, vector<1x4x1x1xf32>
    %38 = vector.shape_cast %37 : vector<1x4x1x1xf32> to vector<4x1x1xf32>
    %39 = vector.broadcast %38 : vector<4x1x1xf32> to vector<4x16x16xf32>
    %40 = arith.addf %36, %39 : vector<4x16x16xf32>
    %41 = arith.maximumf %35, %40 : vector<4x16x16xf32>
    %c0_34 = arith.constant 0 : index
    %c2_35 = arith.constant 2 : index
    %c0_36 = arith.constant 0 : index
    %42 = vector.load %arg5[%c0_34, %c2_35, %c0_36] : memref<4x18x18xf32, #tpu.memory_space<vmem>>, vector<4x16x18xf32>
    %43 = vector.extract_strided_slice %42 {offsets = [0, 0, 0], sizes = [4, 16, 16], strides = [1, 1, 1]} : vector<4x16x18xf32> to vector<4x16x16xf32>
    %c6 = arith.constant 6 : index
    %c0_37 = arith.constant 0 : index
    %c0_38 = arith.constant 0 : index
    %c0_39 = arith.constant 0 : index
    %44 = vector.load %arg3[%c6, %c0_37, %c0_38, %c0_39] : memref<9x4x1x1xf32, #tpu.memory_space<vmem>>, vector<1x4x1x1xf32>
    %45 = vector.shape_cast %44 : vector<1x4x1x1xf32> to vector<4x1x1xf32>
    %46 = vector.broadcast %45 : vector<4x1x1xf32> to vector<4x16x16xf32>
    %47 = arith.addf %43, %46 : vector<4x16x16xf32>
    %48 = arith.maximumf %41, %47 : vector<4x16x16xf32>
    %49 = vector.extract_strided_slice %42 {offsets = [0, 0, 1], sizes = [4, 16, 16], strides = [1, 1, 1]} : vector<4x16x18xf32> to vector<4x16x16xf32>
    %c7 = arith.constant 7 : index
    %c0_40 = arith.constant 0 : index
    %c0_41 = arith.constant 0 : index
    %c0_42 = arith.constant 0 : index
    %50 = vector.load %arg3[%c7, %c0_40, %c0_41, %c0_42] : memref<9x4x1x1xf32, #tpu.memory_space<vmem>>, vector<1x4x1x1xf32>
    %51 = vector.shape_cast %50 : vector<1x4x1x1xf32> to vector<4x1x1xf32>
    %52 = vector.broadcast %51 : vector<4x1x1xf32> to vector<4x16x16xf32>
    %53 = arith.addf %49, %52 : vector<4x16x16xf32>
    %54 = arith.maximumf %48, %53 : vector<4x16x16xf32>
    %55 = vector.extract_strided_slice %42 {offsets = [0, 0, 2], sizes = [4, 16, 16], strides = [1, 1, 1]} : vector<4x16x18xf32> to vector<4x16x16xf32>
    %c8 = arith.constant 8 : index
    %c0_43 = arith.constant 0 : index
    %c0_44 = arith.constant 0 : index
    %c0_45 = arith.constant 0 : index
    %56 = vector.load %arg3[%c8, %c0_43, %c0_44, %c0_45] : memref<9x4x1x1xf32, #tpu.memory_space<vmem>>, vector<1x4x1x1xf32>
    %57 = vector.shape_cast %56 : vector<1x4x1x1xf32> to vector<4x1x1xf32>
    %58 = vector.broadcast %57 : vector<4x1x1xf32> to vector<4x16x16xf32>
    %59 = arith.addf %55, %58 : vector<4x16x16xf32>
    %60 = arith.maximumf %54, %59 : vector<4x16x16xf32>
    %c0_46 = arith.constant 0 : index
    %c0_47 = arith.constant 0 : index
    %c0_48 = arith.constant 0 : index
    %c0_49 = arith.constant 0 : index
    %61 = vector.load %arg4[%c0_46, %c0_47, %c0_48, %c0_49] : memref<1x4x16x16xf32, #tpu.memory_space<vmem>>, vector<1x4x16x16xf32>
    %62 = vector.shape_cast %61 : vector<1x4x16x16xf32> to vector<4x16x16xf32>
    %63 = vector.shape_cast %60 : vector<4x16x16xf32> to vector<1x4x16x16xf32>
    tpu.vector_store %arg4[%c0_46, %c0_47, %c0_48, %c0_49], %63 {strides = array<i32>} : memref<1x4x16x16xf32, #tpu.memory_space<vmem>>, vector<1x4x16x16xf32>,
    return
  }
  func.func @transform_0(%arg0: i32, %arg1: i32) -> (i32, i32, i32, i32) {
    %c0_i32 = arith.constant 0 : i32
    %c0_i32_0 = arith.constant 0 : i32
    %c0_i32_1 = arith.constant 0 : i32
    return %arg0, %arg1, %c0_i32, %c0_i32_0 : i32, i32, i32, i32
  }
  func.func @transform_1(%arg0: i32, %arg1: i32) -> (i32, i32, i32, i32) {
    %c0_i32 = arith.constant 0 : i32
    %c0_i32_0 = arith.constant 0 : i32
    %c0_i32_1 = arith.constant 0 : i32
    %c0_i32_2 = arith.constant 0 : i32
    return %c0_i32, %arg1, %c0_i32_0, %c0_i32_1 : i32, i32, i32, i32
  }
  func.func @transform_2(%arg0: i32, %arg1: i32) -> (i32, i32, i32, i32) {
    %c0_i32 = arith.constant 0 : i32
    %c0_i32_0 = arith.constant 0 : i32
    %c0_i32_1 = arith.constant 0 : i32
    return %arg0, %arg1, %c0_i32, %c0_i32_0 : i32, i32, i32, i32
  }
}

</mosaic_0001>

<llo_original>
// kernel: tpu_custom_call.1
$region0: #{tpu_custom_call.1}
  #allocation0 [shape = 'u32[]', space=smem, size = 0x4, offset = 0x4, fixed_abs, tag = 'smem constant byte address 0x4 - core index']
  #allocation1 [shape = 'u32[144,128]{1,0:T(1,128)}', space=vmem, size = 0x12000, scoped, tag = 'internal scratch']
  #allocation2 [shape = 'f32[4,18,18]{2,1,0:T(8,128)}', space=vmem, size = 0xc000, scoped, tag = 'scratch operand']
  %s0 = inlined_call_operand.hbm [shape: f32[2,4,16,16], index: 0, kind: input, shape index: {}]
  %s1 = inlined_call_operand.vmem [shape: f32[9,4,1,1], index: 1, kind: input, shape index: {}]
  %s2 = inlined_call_operand.hbm [shape: f32[2,4,16,16], index: 2, kind: output, shape index: {}]
  %s3 = sld [smem:[#allocation0]]
  $region45: #{tpu_custom_call.1} parent=0
    _
  %s5 = ssub.s32 1, %s3
  %s6 = scalar_select 0, %s5, %s3
  $region1: #{tpu_custom_call.1} parent=0
    #allocation3 [shape = 'u8[65536]{0}', space=vmem, size = 0x10000, scoped, tag = 'input window, operand 0']
    #allocation4 [shape = 's32[2]{0}', space=sflag, size = 0x8, scoped, tag = 'scoped memory for tpu_custom_call.1']
    #allocation5 [shape = 's32[2]{0}', space=sflag, size = 0x8, scoped, tag = 'scoped memory for tpu_custom_call.1']
    #allocation6 [shape = 'u8[65536]{0}', space=vmem, size = 0x10000, scoped, tag = 'output window, operand 0']
    %7 = vsyncpa [#allocation4], 0
    %s8 = scalar_lea.sflag [#allocation4], 1
    %9 = vsyncpa %s8, 0
    %10 = vsyncpa [#allocation5], 0
    %s11 = scalar_lea.sflag [#allocation5], 1
    %12 = vsyncpa %s11, 0
    loop: start=0, step=1, limit=4
    $region2: #{tpu_custom_call.1} parent=1 // loop_pre_header
      _
    $region3: #{tpu_custom_call.1} parent=1 // loop_header
      %s14 = sphi 0, %s18
      %p15 = scmp.ge.s32.totalorder %s14, 4
      %s21 = sphi 0, %s33
      %s22 = sphi 0, %s29
      %s23 = sphi 0, %s21
      %s24 = sphi 0, %s22
      %s25 = sphi 0, %s23
      %s26 = sphi 0, %s24
      %s38 = sphi 0, %s40
      %s41 = sphi 0, %s38
      %s42 = sphi 0, %s41
      %s58 = sphi 0, %s42
      %s64 = sphi 0, %s66
      %s67 = sphi 0, %s64
      %s68 = sphi 0, %s67
      %s84 = sphi 0, %s68
      %s92 = sphi 0, %s94
      %s95 = sphi 0, %s92
      %s96 = sphi 0, %s95
      %s112 = sphi 0, %s96
    $region4: #{tpu_custom_call.1} parent=1 // loop_header_branch
      %17 = sbr.rel (%p15) target = $region8
    $region5: #{tpu_custom_call.1} parent=1 // loop_body
      %s19 = ssub.s32 %s14, 1
      %s20 = ssub.s32 %s14, 2
      %s27 = sadd.s32 1, %s22
      %p28 = scmp.ge.s32.totalorder %s27, 1
      %s29 = scalar_select %p28, 0, %s27
      %s30 = sadd.s32 1, %s21
      %s31 = scalar_select %p28, %s30, %s21
      %p32 = scmp.ge.s32.totalorder %s31, 2
      %s33 = scalar_select %p32, 0, %s31
      %s34 = ssub.s32 %s21, %s33
      %s35 = ssub.s32 %s22, %s29
      %s36 = sor.u32 %s34, %s35
      %p37 = scmp.eq.s32.totalorder %s36, 0
      %s39 = sadd.s32 %s38, 1
      %s40 = scalar_select %p37, %s38, %s39
      %p43 = pneg %p37
      %p44 = scmp.eq.s32.totalorder %s14, 1
      %p45 = por %p43, %p44
      %p46 = scmp.ne.s32.totalorder %s38, %s41
      %p47 = scmp.eq.s32.totalorder %s14, 0
      %p48 = por %p46, %p47
      %p49 = scmp.ne.s32.totalorder %s38, %s41
      %p50 = scmp.eq.s32.totalorder %s19, 1
      %p51 = por %p49, %p50
      %p52 = scmp.ne.s32.totalorder %s41, %s42
      %p53 = scmp.eq.s32.totalorder %s19, 0
      %p54 = por %p52, %p53
      %p55 = scmp.ne.s32.totalorder %s41, %s42
      %p56 = scmp.eq.s32.totalorder %s20, 1
      %p57 = por %p55, %p56
      %p59 = scmp.ne.s32.totalorder %s42, %s58
      %p60 = scmp.eq.s32.totalorder %s20, 0
      %p61 = por %p59, %p60
      %s62 = ssub.s32 %s22, %s29
      %p63 = scmp.eq.s32.totalorder %s62, 0
      %s65 = sadd.s32 %s64, 1
      %s66 = scalar_select %p63, %s64, %s65
      %p69 = pneg %p63
      %p70 = scmp.eq.s32.totalorder %s14, 1
      %p71 = por %p69, %p70
      %p72 = scmp.ne.s32.totalorder %s64, %s67
      %p73 = scmp.eq.s32.totalorder %s14, 0
      %p74 = por %p72, %p73
      %p75 = scmp.ne.s32.totalorder %s64, %s67
      %p76 = scmp.eq.s32.totalorder %s19, 1
      %p77 = por %p75, %p76
      %p78 = scmp.ne.s32.totalorder %s67, %s68
      %p79 = scmp.eq.s32.totalorder %s19, 0
      %p80 = por %p78, %p79
      %p81 = scmp.ne.s32.totalorder %s67, %s68
      %p82 = scmp.eq.s32.totalorder %s20, 1
      %p83 = por %p81, %p82
      %p85 = scmp.ne.s32.totalorder %s68, %s84
      %p86 = scmp.eq.s32.totalorder %s20, 0
      %p87 = por %p85, %p86
      %s88 = ssub.s32 %s21, %s33
      %s89 = ssub.s32 %s22, %s29
      %s90 = sor.u32 %s88, %s89
      %p91 = scmp.eq.s32.totalorder %s90, 0
      %s93 = sadd.s32 %s92, 1
      %s94 = scalar_select %p91, %s92, %s93
      %p97 = pneg %p91
      %p98 = scmp.eq.s32.totalorder %s14, 1
      %p99 = por %p97, %p98
      %p100 = scmp.ne.s32.totalorder %s92, %s95
      %p101 = scmp.eq.s32.totalorder %s14, 0
      %p102 = por %p100, %p101
      %p103 = scmp.ne.s32.totalorder %s92, %s95
      %p104 = scmp.eq.s32.totalorder %s19, 1
      %p105 = por %p103, %p104
      %p106 = scmp.ne.s32.totalorder %s95, %s96
      %p107 = scmp.eq.s32.totalorder %s19, 0
      %p108 = por %p106, %p107
      %p109 = scmp.ne.s32.totalorder %s95, %s96
      %p110 = scmp.eq.s32.totalorder %s20, 1
      %p111 = por %p109, %p110
      %p113 = scmp.ne.s32.totalorder %s96, %s112
      %p114 = scmp.eq.s32.totalorder %s20, 0
      %p115 = por %p113, %p114
      %p116 = scmp.le.s32.totalorder 1, %s14
      %p117 = scmp.lt.s32.totalorder %s14, 3
      %p118 = pnand %p116, %p117
      %p119 = pneg %p118
      // Predicated region
      $region9: #{tpu_custom_call.1} parent=5 // pred_check
        _
      $region10: #{tpu_custom_call.1} parent=5 // pred_check_branch
        %121 = sbr.rel (%p118) target = $region12
      $region11: #{tpu_custom_call.1} parent=5 // pred_region
        %s122 = ssub.s32 %s14, 1
        // Predicated region
        $region13: #{tpu_custom_call.1} parent=11 // pred_check
          %p123 = pneg %p80
        $region14: #{tpu_custom_call.1} parent=11 // pred_check_branch
          %125 = sbr.rel (%p123) target = $region16
        $region15: #{tpu_custom_call.1} parent=11 // pred_region
          %s126 = smul.u32 4, %s24
          %p127 = scmp.lt.s32.totalorder %s126, 3
          %s128 = scalar_select %p127, %s126, 3
          %s129 = scalar_lea.vmem %s1, %s128
          %s130 = smul.u32 4, %s24
        $region16: #{tpu_custom_call.1} parent=11 // pred_fallthru
          _
      $region12: #{tpu_custom_call.1} parent=5 // pred_fallthru
        _
      %p131 = scmp.lt.s32.totalorder %s14, 2
      // Predicated region
      $region17: #{tpu_custom_call.1} parent=5 // pred_check
        %p132 = pneg %p131
      $region18: #{tpu_custom_call.1} parent=5 // pred_check_branch
        %134 = sbr.rel (%p132) target = $region20
      $region19: #{tpu_custom_call.1} parent=5 // pred_region
        // Predicated region
        $region21: #{tpu_custom_call.1} parent=19 // pred_check
          %p135 = pneg %p48
        $region22: #{tpu_custom_call.1} parent=19 // pred_check_branch
          %137 = sbr.rel (%p135) target = $region24
        $region23: #{tpu_custom_call.1} parent=19 // pred_region
          %s138 = sand.u32 %s38, 1
          %s139 = scalar_lea.sflag [#allocation4], %s138
          %s140 = sand.u32 %s38, 1
          %s141 = smul.addr %s140, 64
          %s142 = scalar_lea.vmem [#allocation3], %s141
          %s143 = smul.u32 4, %s22
          %s145 = ssub.s32 1024, 1024
          %146 = vsyncadd %s139, %s145
          %s147 = smul.addr %s143, 2
          %s148 = smul.addr %s21, 8
          %s149 = sadd.s32 %s147, %s148
          %s150 = smul.addr %s149, 128
          %s151 = scalar_lea.hbm %s0, %s150
          %s152 = sshll.u32 %s142, 4
          %s153 = int_to_ptr.vmem [resolvable:$true] %s152
          %158 = dma.hbm_to_vmem [thread:$0]  %s151, 1024, %s153, %s139, 128, 128, 8
        $region24: #{tpu_custom_call.1} parent=19 // pred_fallthru
          _
      $region20: #{tpu_custom_call.1} parent=5 // pred_fallthru
        _
      %p159 = scmp.le.s32.totalorder 1, %s14
      %p160 = scmp.lt.s32.totalorder %s14, 3
      %p161 = pnand %p159, %p160
      %p162 = pneg %p161
      // Predicated region
      $region25: #{tpu_custom_call.1} parent=5 // pred_check
        _
      $region26: #{tpu_custom_call.1} parent=5 // pred_check_branch
        %164 = sbr.rel (%p161) target = $region28
      $region27: #{tpu_custom_call.1} parent=5 // pred_region
        %s165 = ssub.s32 %s14, 1
        %s166 = sand.u32 %s41, 1
        %s167 = scalar_lea.sflag [#allocation4], %s166
        %s168 = sand.u32 %s41, 1
        %s169 = smul.addr %s168, 64
        %s170 = scalar_lea.vmem [#allocation3], %s169
        // Predicated region
        $region29: #{tpu_custom_call.1} parent=27 // pred_check
          %p171 = pneg %p54
        $region30: #{tpu_custom_call.1} parent=27 // pred_check_branch
          %173 = sbr.rel (%p171) target = $region32
        $region31: #{tpu_custom_call.1} parent=27 // pred_region
          %174 = dma.done %s167, 1024
        $region32: #{tpu_custom_call.1} parent=27 // pred_fallthru
          _
        %s175 = sand.u32 %s41, 1
        %s176 = scalar_lea.sflag [#allocation4], %s175
        %s177 = sand.u32 %s41, 1
        %s178 = smul.addr %s177, 64
        %s179 = scalar_lea.vmem [#allocation3], %s178
        %p180 = pneg %p54
        %p181 = pneg %p51
        %s182 = smul.u32 4, %s24
        %p183 = scmp.lt.s32.totalorder %s182, 3
        %s184 = scalar_select %p183, %s182, 3
        %s185 = scalar_lea.vmem %s1, %s184
        %p186 = pneg %p80
        %p187 = pneg %p77
        %p188 = pneg %p108
        %p189 = pneg %p105
        %s190 = sand.u32 %s95, 1
        %s191 = scalar_lea.sflag [#allocation5], %s190
        %s192 = sand.u32 %s95, 1
        %s193 = smul.addr %s192, 64
        %s194 = scalar_lea.vmem [#allocation6], %s193
        %s195 = smul.u32 4, %s24
        %s196 = smul.u32 4, %s24
        %p197 = scmp.lt.s32.totalorder %s196, 3
        %s198 = scalar_select %p197, %s196, 3
        %s199 = scalar_lea.vmem %s1, %s198
        %s200 = smul.u32 4, %s24
        %s201 = smul.u32 4, %s24
        %vm202 = vcmask 146432
        %203 = vst.msk [vmem:[#allocation2] sm:$0xff] %vm202, 0.0
        %204 = vst.msk [vmem:[#allocation2 + $0x8] sm:$0xff] %vm202, 0.0
        %vm205 = vcmask 140288
        %206 = vst.msk [vmem:[#allocation2 + $0x10] sm:$0x3] %vm205, 0.0
        %207 = vst.msk [vmem:[#allocation2 + $0x18] sm:$0xff] %vm202, 0.0
        %208 = vst.msk [vmem:[#allocation2 + $0x20] sm:$0xff] %vm202, 0.0
        %209 = vst.msk [vmem:[#allocation2 + $0x28] sm:$0x3] %vm205, 0.0
        %210 = vst.msk [vmem:[#allocation2 + $0x30] sm:$0xff] %vm202, 0.0
        %211 = vst.msk [vmem:[#allocation2 + $0x38] sm:$0xff] %vm202, 0.0
        %212 = vst.msk [vmem:[#allocation2 + $0x40] sm:$0x3] %vm205, 0.0
        %213 = vst.msk [vmem:[#allocation2 + $0x48] sm:$0xff] %vm202, 0.0
        %214 = vst.msk [vmem:[#allocation2 + $0x50] sm:$0xff] %vm202, 0.0
        %215 = vst.msk [vmem:[#allocation2 + $0x58] sm:$0x3] %vm205, 0.0
        %v216 = vld [vmem:[%s170] sm:$0xff]
        %v217 = vld [vmem:[%s170 + $0x8] sm:$0xff]
        %v218 = vld [vmem:[%s170 + $0x10] sm:$0xff]
        %v219 = vld [vmem:[%s170 + $0x18] sm:$0xff]
        %v220 = vld [vmem:[%s170 + $0x20] sm:$0xff]
        %v221 = vld [vmem:[%s170 + $0x28] sm:$0xff]
        %v222 = vld [vmem:[%s170 + $0x30] sm:$0xff]
        %v223 = vld [vmem:[%s170 + $0x38] sm:$0xff]
        %232 = vrot.lane.b32.xlu0 %v216, 1
        %v233 = vpop.permute.xlu0 %232
        %234 = vrot.lane.b32.xlu0 %v217, 1
        %v235 = vpop.permute.xlu0 %234
        %236 = vrot.lane.b32.xlu0 %v218, 1
        %v237 = vpop.permute.xlu0 %236
        %238 = vrot.lane.b32.xlu0 %v219, 1
        %v239 = vpop.permute.xlu0 %238
        %240 = vrot.lane.b32.xlu0 %v220, 1
        %v241 = vpop.permute.xlu0 %240
        %242 = vrot.lane.b32.xlu0 %v221, 1
        %v243 = vpop.permute.xlu0 %242
        %244 = vrot.lane.b32.xlu0 %v222, 1
        %v245 = vpop.permute.xlu0 %244
        %246 = vrot.lane.b32.xlu0 %v223, 1
        %v247 = vpop.permute.xlu0 %246
        %vm256 = vcmask 138248
        %257 = vst.msk [vmem:[#allocation2 + $0x1] sm:$0xff] %vm256, %v233
        %258 = vst.msk [vmem:[#allocation2 + $0x9] sm:$0xff] %vm256, %v235
        %259 = vst.msk [vmem:[#allocation2 + $0x19] sm:$0xff] %vm256, %v237
        %260 = vst.msk [vmem:[#allocation2 + $0x21] sm:$0xff] %vm256, %v239
        %261 = vst.msk [vmem:[#allocation2 + $0x31] sm:$0xff] %vm256, %v241
        %262 = vst.msk [vmem:[#allocation2 + $0x39] sm:$0xff] %vm256, %v243
        %263 = vst.msk [vmem:[#allocation2 + $0x49] sm:$0xff] %vm256, %v245
        %264 = vst.msk [vmem:[#allocation2 + $0x51] sm:$0xff] %vm256, %v247
        %v265 = vld [vmem:[#allocation2] sm:$0xff]
        %v266 = vld [vmem:[#allocation2 + $0x8] sm:$0xff]
        %v267 = vld [vmem:[#allocation2 + $0x18] sm:$0xff]
        %v268 = vld [vmem:[#allocation2 + $0x20] sm:$0xff]
        %v269 = vld [vmem:[#allocation2 + $0x30] sm:$0xff]
        %v270 = vld [vmem:[#allocation2 + $0x38] sm:$0xff]
        %v271 = vld [vmem:[#allocation2 + $0x48] sm:$0xff]
        %v272 = vld [vmem:[#allocation2 + $0x50] sm:$0xff]
        %v273 = vld [vmem:[%s199] sm:$0x1]
        %v274 = vld [vmem:[%s199 + $0x1] sm:$0x1]
        %v275 = vld [vmem:[%s199 + $0x2] sm:$0x1]
        %v276 = vld [vmem:[%s199 + $0x3] sm:$0x1]
        %v281 = vlaneseq
        %v282 = vshrl.u32 %v281, 7
        %v283 = vsub.s32 0, %v282
        %v284 = vrot.slane %v273, %v283
        %v285 = vlaneseq
        %v286 = vshrl.u32 %v285, 7
        %v287 = vsub.s32 0, %v286
        %v288 = vrot.slane %v274, %v287
        %v289 = vlaneseq
        %v290 = vshrl.u32 %v289, 7
        %v291 = vsub.s32 0, %v290
        %v292 = vrot.slane %v275, %v291
        %v293 = vlaneseq
        %v294 = vshrl.u32 %v293, 7
        %v295 = vsub.s32 0, %v294
        %v296 = vrot.slane %v276, %v295
        %297 = vset.pattern.permute.xlu0 0
        %298 = vperm.xlu0 %297, %v284
        %v299 = vpop.permute.xlu0 %298
        %301 = vset.pattern.permute.xlu0 0
        %302 = vperm.xlu0 %301, %v288
        %v303 = vpop.permute.xlu0 %302
        %305 = vset.pattern.permute.xlu0 0
        %306 = vperm.xlu0 %305, %v292
        %v307 = vpop.permute.xlu0 %306
        %309 = vset.pattern.permute.xlu0 0
        %310 = vperm.xlu0 %309, %v296
        %v311 = vpop.permute.xlu0 %310
        %v313 = vadd.f32 %v265, %v299
        %v314 = vadd.f32 %v266, %v299
        %v315 = vadd.f32 %v267, %v303
        %v316 = vadd.f32 %v268, %v303
        %v317 = vadd.f32 %v269, %v307
        %v318 = vadd.f32 %v270, %v307
        %v319 = vadd.f32 %v271, %v311
        %v320 = vadd.f32 %v272, %v311
        %s321 = scalar_lea.vmem %s199, 4
        %v322 = vld [vmem:[%s321] sm:$0x1]
        %v323 = vld [vmem:[%s321 + $0x1] sm:$0x1]
        %v324 = vld [vmem:[%s321 + $0x2] sm:$0x1]
        %v325 = vld [vmem:[%s321 + $0x3] sm:$0x1]
        %v330 = vlaneseq
        %v331 = vshrl.u32 %v330, 7
        %v332 = vsub.s32 0, %v331
        %v333 = vrot.slane %v322, %v332
        %v334 = vlaneseq
        %v335 = vshrl.u32 %v334, 7
        %v336 = vsub.s32 0, %v335
        %v337 = vrot.slane %v323, %v336
        %v338 = vlaneseq
        %v339 = vshrl.u32 %v338, 7
        %v340 = vsub.s32 0, %v339
        %v341 = vrot.slane %v324, %v340
        %v342 = vlaneseq
        %v343 = vshrl.u32 %v342, 7
        %v344 = vsub.s32 0, %v343
        %v345 = vrot.slane %v325, %v344
        %346 = vset.pattern.permute.xlu0 0
        %347 = vperm.xlu0 %346, %v333
        %v348 = vpop.permute.xlu0 %347
        %350 = vset.pattern.permute.xlu0 0
        %351 = vperm.xlu0 %350, %v337
        %v352 = vpop.permute.xlu0 %351
        %354 = vset.pattern.permute.xlu0 0
        %355 = vperm.xlu0 %354, %v341
        %v356 = vpop.permute.xlu0 %355
        %358 = vset.pattern.permute.xlu0 0
        %359 = vperm.xlu0 %358, %v345
        %v360 = vpop.permute.xlu0 %359
        %v362 = vadd.f32 %v265, %v348
        %v363 = vadd.f32 %v266, %v348
        %v364 = vadd.f32 %v267, %v352
        %v365 = vadd.f32 %v268, %v352
        %v366 = vadd.f32 %v269, %v356
        %v367 = vadd.f32 %v270, %v356
        %v368 = vadd.f32 %v271, %v360
        %v369 = vadd.f32 %v272, %v360
        %378 = vrot.lane.b32.xlu0 %v362, 127
        %v379 = vpop.permute.xlu0 %378
        %380 = vrot.lane.b32.xlu0 %v363, 127
        %v381 = vpop.permute.xlu0 %380
        %382 = vrot.lane.b32.xlu0 %v364, 127
        %v383 = vpop.permute.xlu0 %382
        %384 = vrot.lane.b32.xlu0 %v365, 127
        %v385 = vpop.permute.xlu0 %384
        %386 = vrot.lane.b32.xlu0 %v366, 127
        %v387 = vpop.permute.xlu0 %386
        %388 = vrot.lane.b32.xlu0 %v367, 127
        %v389 = vpop.permute.xlu0 %388
        %390 = vrot.lane.b32.xlu0 %v368, 127
        %v391 = vpop.permute.xlu0 %390
        %392 = vrot.lane.b32.xlu0 %v369, 127
        %v393 = vpop.permute.xlu0 %392
        %v402 = vmax.f32 %v313, %v379
        %v403 = vmax.f32 %v314, %v381
        %v404 = vmax.f32 %v315, %v383
        %v405 = vmax.f32 %v316, %v385
        %v406 = vmax.f32 %v317, %v387
        %v407 = vmax.f32 %v318, %v389
        %v408 = vmax.f32 %v319, %v391
        %v409 = vmax.f32 %v320, %v393
        %s410 = scalar_lea.vmem %s199, 8
        %v411 = vld [vmem:[%s410] sm:$0x1]
        %v412 = vld [vmem:[%s410 + $0x1] sm:$0x1]
        %v413 = vld [vmem:[%s410 + $0x2] sm:$0x1]
        %v414 = vld [vmem:[%s410 + $0x3] sm:$0x1]
        %v419 = vlaneseq
        %v420 = vshrl.u32 %v419, 7
        %v421 = vsub.s32 0, %v420
        %v422 = vrot.slane %v411, %v421
        %v423 = vlaneseq
        %v424 = vshrl.u32 %v423, 7
        %v425 = vsub.s32 0, %v424
        %v426 = vrot.slane %v412, %v425
        %v427 = vlaneseq
        %v428 = vshrl.u32 %v427, 7
        %v429 = vsub.s32 0, %v428
        %v430 = vrot.slane %v413, %v429
        %v431 = vlaneseq
        %v432 = vshrl.u32 %v431, 7
        %v433 = vsub.s32 0, %v432
        %v434 = vrot.slane %v414, %v433
        %435 = vset.pattern.permute.xlu0 0
        %436 = vperm.xlu0 %435, %v422
        %v437 = vpop.permute.xlu0 %436
        %439 = vset.pattern.permute.xlu0 0
        %440 = vperm.xlu0 %439, %v426
        %v441 = vpop.permute.xlu0 %440
        %443 = vset.pattern.permute.xlu0 0
        %444 = vperm.xlu0 %443, %v430
        %v445 = vpop.permute.xlu0 %444
        %447 = vset.pattern.permute.xlu0 0
        %448 = vperm.xlu0 %447, %v434
        %v449 = vpop.permute.xlu0 %448
        %v451 = vadd.f32 %v265, %v437
        %v452 = vadd.f32 %v266, %v437
        %v453 = vadd.f32 %v267, %v441
        %v454 = vadd.f32 %v268, %v441
        %v455 = vadd.f32 %v269, %v445
        %v456 = vadd.f32 %v270, %v445
        %v457 = vadd.f32 %v271, %v449
        %v458 = vadd.f32 %v272, %v449
        %467 = vrot.lane.b32.xlu0 %v451, 126
        %v468 = vpop.permute.xlu0 %467
        %469 = vrot.lane.b32.xlu0 %v452, 126
        %v470 = vpop.permute.xlu0 %469
        %471 = vrot.lane.b32.xlu0 %v453, 126
        %v472 = vpop.permute.xlu0 %471
        %473 = vrot.lane.b32.xlu0 %v454, 126
        %v474 = vpop.permute.xlu0 %473
        %475 = vrot.lane.b32.xlu0 %v455, 126
        %v476 = vpop.permute.xlu0 %475
        %477 = vrot.lane.b32.xlu0 %v456, 126
        %v478 = vpop.permute.xlu0 %477
        %479 = vrot.lane.b32.xlu0 %v457, 126
        %v480 = vpop.permute.xlu0 %479
        %481 = vrot.lane.b32.xlu0 %v458, 126
        %v482 = vpop.permute.xlu0 %481
        %v491 = vmax.f32 %v402, %v468
        %v492 = vmax.f32 %v403, %v470
        %v493 = vmax.f32 %v404, %v472
        %v494 = vmax.f32 %v405, %v474
        %v495 = vmax.f32 %v406, %v476
        %v496 = vmax.f32 %v407, %v478
        %v497 = vmax.f32 %v408, %v480
        %v498 = vmax.f32 %v409, %v482
        %v499 = vld [vmem:[#allocation2 + $0x1] sm:$0xff]
        %v500 = vld [vmem:[#allocation2 + $0x9] sm:$0xff]
        %v501 = vld [vmem:[#allocation2 + $0x19] sm:$0xff]
        %v502 = vld [vmem:[#allocation2 + $0x21] sm:$0xff]
        %v503 = vld [vmem:[#allocation2 + $0x31] sm:$0xff]
        %v504 = vld [vmem:[#allocation2 + $0x39] sm:$0xff]
        %v505 = vld [vmem:[#allocation2 + $0x49] sm:$0xff]
        %v506 = vld [vmem:[#allocation2 + $0x51] sm:$0xff]
        %s507 = scalar_lea.vmem %s199, 12
        %v508 = vld [vmem:[%s507] sm:$0x1]
        %v509 = vld [vmem:[%s507 + $0x1] sm:$0x1]
        %v510 = vld [vmem:[%s507 + $0x2] sm:$0x1]
        %v511 = vld [vmem:[%s507 + $0x3] sm:$0x1]
        %v516 = vlaneseq
        %v517 = vshrl.u32 %v516, 7
        %v518 = vsub.s32 0, %v517
        %v519 = vrot.slane %v508, %v518
        %v520 = vlaneseq
        %v521 = vshrl.u32 %v520, 7
        %v522 = vsub.s32 0, %v521
        %v523 = vrot.slane %v509, %v522
        %v524 = vlaneseq
        %v525 = vshrl.u32 %v524, 7
        %v526 = vsub.s32 0, %v525
        %v527 = vrot.slane %v510, %v526
        %v528 = vlaneseq
        %v529 = vshrl.u32 %v528, 7
        %v530 = vsub.s32 0, %v529
        %v531 = vrot.slane %v511, %v530
        %532 = vset.pattern.permute.xlu0 0
        %533 = vperm.xlu0 %532, %v519
        %v534 = vpop.permute.xlu0 %533
        %536 = vset.pattern.permute.xlu0 0
        %537 = vperm.xlu0 %536, %v523
        %v538 = vpop.permute.xlu0 %537
        %540 = vset.pattern.permute.xlu0 0
        %541 = vperm.xlu0 %540, %v527
        %v542 = vpop.permute.xlu0 %541
        %544 = vset.pattern.permute.xlu0 0
        %545 = vperm.xlu0 %544, %v531
        %v546 = vpop.permute.xlu0 %545
        %v548 = vadd.f32 %v499, %v534
        %v549 = vadd.f32 %v500, %v534
        %v550 = vadd.f32 %v501, %v538
        %v551 = vadd.f32 %v502, %v538
        %v552 = vadd.f32 %v503, %v542
        %v553 = vadd.f32 %v504, %v542
        %v554 = vadd.f32 %v505, %v546
        %v555 = vadd.f32 %v506, %v546
        %v556 = vmax.f32 %v491, %v548
        %v557 = vmax.f32 %v492, %v549
        %v558 = vmax.f32 %v493, %v550
        %v559 = vmax.f32 %v494, %v551
        %v560 = vmax.f32 %v495, %v552
        %v561 = vmax.f32 %v496, %v553
        %v562 = vmax.f32 %v497, %v554
        %v563 = vmax.f32 %v498, %v555
        %s564 = scalar_lea.vmem %s199, 16
        %v565 = vld [vmem:[%s564] sm:$0x1]
        %v566 = vld [vmem:[%s564 + $0x1] sm:$0x1]
        %v567 = vld [vmem:[%s564 + $0x2] sm:$0x1]
        %v568 = vld [vmem:[%s564 + $0x3] sm:$0x1]
        %v573 = vlaneseq
        %v574 = vshrl.u32 %v573, 7
        %v575 = vsub.s32 0, %v574
        %v576 = vrot.slane %v565, %v575
        %v577 = vlaneseq
        %v578 = vshrl.u32 %v577, 7
        %v579 = vsub.s32 0, %v578
        %v580 = vrot.slane %v566, %v579
        %v581 = vlaneseq
        %v582 = vshrl.u32 %v581, 7
        %v583 = vsub.s32 0, %v582
        %v584 = vrot.slane %v567, %v583
        %v585 = vlaneseq
        %v586 = vshrl.u32 %v585, 7
        %v587 = vsub.s32 0, %v586
        %v588 = vrot.slane %v568, %v587
        %589 = vset.pattern.permute.xlu0 0
        %590 = vperm.xlu0 %589, %v576
        %v591 = vpop.permute.xlu0 %590
        %593 = vset.pattern.permute.xlu0 0
        %594 = vperm.xlu0 %593, %v580
        %v595 = vpop.permute.xlu0 %594
        %597 = vset.pattern.permute.xlu0 0
        %598 = vperm.xlu0 %597, %v584
        %v599 = vpop.permute.xlu0 %598
        %601 = vset.pattern.permute.xlu0 0
        %602 = vperm.xlu0 %601, %v588
        %v603 = vpop.permute.xlu0 %602
        %v605 = vadd.f32 %v499, %v591
        %v606 = vadd.f32 %v500, %v591
        %v607 = vadd.f32 %v501, %v595
        %v608 = vadd.f32 %v502, %v595
        %v609 = vadd.f32 %v503, %v599
        %v610 = vadd.f32 %v504, %v599
        %v611 = vadd.f32 %v505, %v603
        %v612 = vadd.f32 %v506, %v603
        %621 = vrot.lane.b32.xlu0 %v605, 127
        %v622 = vpop.permute.xlu0 %621
        %623 = vrot.lane.b32.xlu0 %v606, 127
        %v624 = vpop.permute.xlu0 %623
        %625 = vrot.lane.b32.xlu0 %v607, 127
        %v626 = vpop.permute.xlu0 %625
        %627 = vrot.lane.b32.xlu0 %v608, 127
        %v628 = vpop.permute.xlu0 %627
        %629 = vrot.lane.b32.xlu0 %v609, 127
        %v630 = vpop.permute.xlu0 %629
        %631 = vrot.lane.b32.xlu0 %v610, 127
        %v632 = vpop.permute.xlu0 %631
        %633 = vrot.lane.b32.xlu0 %v611, 127
        %v634 = vpop.permute.xlu0 %633
        %635 = vrot.lane.b32.xlu0 %v612, 127
        %v636 = vpop.permute.xlu0 %635
        %v645 = vmax.f32 %v556, %v622
        %v646 = vmax.f32 %v557, %v624
        %v647 = vmax.f32 %v558, %v626
        %v648 = vmax.f32 %v559, %v628
        %v649 = vmax.f32 %v560, %v630
        %v650 = vmax.f32 %v561, %v632
        %v651 = vmax.f32 %v562, %v634
        %v652 = vmax.f32 %v563, %v636
        %s653 = scalar_lea.vmem %s199, 20
        %v654 = vld [vmem:[%s653] sm:$0x1]
        %v655 = vld [vmem:[%s653 + $0x1] sm:$0x1]
        %v656 = vld [vmem:[%s653 + $0x2] sm:$0x1]
        %v657 = vld [vmem:[%s653 + $0x3] sm:$0x1]
        %v662 = vlaneseq
        %v663 = vshrl.u32 %v662, 7
        %v664 = vsub.s32 0, %v663
        %v665 = vrot.slane %v654, %v664
        %v666 = vlaneseq
        %v667 = vshrl.u32 %v666, 7
        %v668 = vsub.s32 0, %v667
        %v669 = vrot.slane %v655, %v668
        %v670 = vlaneseq
        %v671 = vshrl.u32 %v670, 7
        %v672 = vsub.s32 0, %v671
        %v673 = vrot.slane %v656, %v672
        %v674 = vlaneseq
        %v675 = vshrl.u32 %v674, 7
        %v676 = vsub.s32 0, %v675
        %v677 = vrot.slane %v657, %v676
        %678 = vset.pattern.permute.xlu0 0
        %679 = vperm.xlu0 %678, %v665
        %v680 = vpop.permute.xlu0 %679
        %682 = vset.pattern.permute.xlu0 0
        %683 = vperm.xlu0 %682, %v669
        %v684 = vpop.permute.xlu0 %683
        %686 = vset.pattern.permute.xlu0 0
        %687 = vperm.xlu0 %686, %v673
        %v688 = vpop.permute.xlu0 %687
        %690 = vset.pattern.permute.xlu0 0
        %691 = vperm.xlu0 %690, %v677
        %v692 = vpop.permute.xlu0 %691
        %v694 = vadd.f32 %v499, %v680
        %v695 = vadd.f32 %v500, %v680
        %v696 = vadd.f32 %v501, %v684
        %v697 = vadd.f32 %v502, %v684
        %v698 = vadd.f32 %v503, %v688
        %v699 = vadd.f32 %v504, %v688
        %v700 = vadd.f32 %v505, %v692
        %v701 = vadd.f32 %v506, %v692
        %710 = vrot.lane.b32.xlu0 %v694, 126
        %v711 = vpop.permute.xlu0 %710
        %712 = vrot.lane.b32.xlu0 %v695, 126
        %v713 = vpop.permute.xlu0 %712
        %714 = vrot.lane.b32.xlu0 %v696, 126
        %v715 = vpop.permute.xlu0 %714
        %716 = vrot.lane.b32.xlu0 %v697, 126
        %v717 = vpop.permute.xlu0 %716
        %718 = vrot.lane.b32.xlu0 %v698, 126
        %v719 = vpop.permute.xlu0 %718
        %720 = vrot.lane.b32.xlu0 %v699, 126
        %v721 = vpop.permute.xlu0 %720
        %722 = vrot.lane.b32.xlu0 %v700, 126
        %v723 = vpop.permute.xlu0 %722
        %724 = vrot.lane.b32.xlu0 %v701, 126
        %v725 = vpop.permute.xlu0 %724
        %v734 = vmax.f32 %v645, %v711
        %v735 = vmax.f32 %v646, %v713
        %v736 = vmax.f32 %v647, %v715
        %v737 = vmax.f32 %v648, %v717
        %v738 = vmax.f32 %v649, %v719
        %v739 = vmax.f32 %v650, %v721
        %v740 = vmax.f32 %v651, %v723
        %v741 = vmax.f32 %v652, %v725
        %v742 = vld [vmem:[#allocation2 + $0x2] sm:$0xff]
        %v743 = vld [vmem:[#allocation2 + $0xa] sm:$0xff]
        %v744 = vld [vmem:[#allocation2 + $0x1a] sm:$0xff]
        %v745 = vld [vmem:[#allocation2 + $0x22] sm:$0xff]
        %v746 = vld [vmem:[#allocation2 + $0x32] sm:$0xff]
        %v747 = vld [vmem:[#allocation2 + $0x3a] sm:$0xff]
        %v748 = vld [vmem:[#allocation2 + $0x4a] sm:$0xff]
        %v749 = vld [vmem:[#allocation2 + $0x52] sm:$0xff]
        %s750 = scalar_lea.vmem %s199, 24
        %v751 = vld [vmem:[%s750] sm:$0x1]
        %v752 = vld [vmem:[%s750 + $0x1] sm:$0x1]
        %v753 = vld [vmem:[%s750 + $0x2] sm:$0x1]
        %v754 = vld [vmem:[%s750 + $0x3] sm:$0x1]
        %v759 = vlaneseq
        %v760 = vshrl.u32 %v759, 7
        %v761 = vsub.s32 0, %v760
        %v762 = vrot.slane %v751, %v761
        %v763 = vlaneseq
        %v764 = vshrl.u32 %v763, 7
        %v765 = vsub.s32 0, %v764
        %v766 = vrot.slane %v752, %v765
        %v767 = vlaneseq
        %v768 = vshrl.u32 %v767, 7
        %v769 = vsub.s32 0, %v768
        %v770 = vrot.slane %v753, %v769
        %v771 = vlaneseq
        %v772 = vshrl.u32 %v771, 7
        %v773 = vsub.s32 0, %v772
        %v774 = vrot.slane %v754, %v773
        %775 = vset.pattern.permute.xlu0 0
        %776 = vperm.xlu0 %775, %v762
        %v777 = vpop.permute.xlu0 %776
        %779 = vset.pattern.permute.xlu0 0
        %780 = vperm.xlu0 %779, %v766
        %v781 = vpop.permute.xlu0 %780
        %783 = vset.pattern.permute.xlu0 0
        %784 = vperm.xlu0 %783, %v770
        %v785 = vpop.permute.xlu0 %784
        %787 = vset.pattern.permute.xlu0 0
        %788 = vperm.xlu0 %787, %v774
        %v789 = vpop.permute.xlu0 %788
        %v791 = vadd.f32 %v742, %v777
        %v792 = vadd.f32 %v743, %v777
        %v793 = vadd.f32 %v744, %v781
        %v794 = vadd.f32 %v745, %v781
        %v795 = vadd.f32 %v746, %v785
        %v796 = vadd.f32 %v747, %v785
        %v797 = vadd.f32 %v748, %v789
        %v798 = vadd.f32 %v749, %v789
        %v799 = vmax.f32 %v734, %v791
        %v800 = vmax.f32 %v735, %v792
        %v801 = vmax.f32 %v736, %v793
        %v802 = vmax.f32 %v737, %v794
        %v803 = vmax.f32 %v738, %v795
        %v804 = vmax.f32 %v739, %v796
        %v805 = vmax.f32 %v740, %v797
        %v806 = vmax.f32 %v741, %v798
        %s807 = scalar_lea.vmem %s199, 28
        %v808 = vld [vmem:[%s807] sm:$0x1]
        %v809 = vld [vmem:[%s807 + $0x1] sm:$0x1]
        %v810 = vld [vmem:[%s807 + $0x2] sm:$0x1]
        %v811 = vld [vmem:[%s807 + $0x3] sm:$0x1]
        %v816 = vlaneseq
        %v817 = vshrl.u32 %v816, 7
        %v818 = vsub.s32 0, %v817
        %v819 = vrot.slane %v808, %v818
        %v820 = vlaneseq
        %v821 = vshrl.u32 %v820, 7
        %v822 = vsub.s32 0, %v821
        %v823 = vrot.slane %v809, %v822
        %v824 = vlaneseq
        %v825 = vshrl.u32 %v824, 7
        %v826 = vsub.s32 0, %v825
        %v827 = vrot.slane %v810, %v826
        %v828 = vlaneseq
        %v829 = vshrl.u32 %v828, 7
        %v830 = vsub.s32 0, %v829
        %v831 = vrot.slane %v811, %v830
        %832 = vset.pattern.permute.xlu0 0
        %833 = vperm.xlu0 %832, %v819
        %v834 = vpop.permute.xlu0 %833
        %836 = vset.pattern.permute.xlu0 0
        %837 = vperm.xlu0 %836, %v823
        %v838 = vpop.permute.xlu0 %837
        %840 = vset.pattern.permute.xlu0 0
        %841 = vperm.xlu0 %840, %v827
        %v842 = vpop.permute.xlu0 %841
        %844 = vset.pattern.permute.xlu0 0
        %845 = vperm.xlu0 %844, %v831
        %v846 = vpop.permute.xlu0 %845
        %v848 = vadd.f32 %v742, %v834
        %v849 = vadd.f32 %v743, %v834
        %v850 = vadd.f32 %v744, %v838
        %v851 = vadd.f32 %v745, %v838
        %v852 = vadd.f32 %v746, %v842
        %v853 = vadd.f32 %v747, %v842
        %v854 = vadd.f32 %v748, %v846
        %v855 = vadd.f32 %v749, %v846
        %864 = vrot.lane.b32.xlu0 %v848, 127
        %v865 = vpop.permute.xlu0 %864
        %866 = vrot.lane.b32.xlu0 %v849, 127
        %v867 = vpop.permute.xlu0 %866
        %868 = vrot.lane.b32.xlu0 %v850, 127
        %v869 = vpop.permute.xlu0 %868
        %870 = vrot.lane.b32.xlu0 %v851, 127
        %v871 = vpop.permute.xlu0 %870
        %872 = vrot.lane.b32.xlu0 %v852, 127
        %v873 = vpop.permute.xlu0 %872
        %874 = vrot.lane.b32.xlu0 %v853, 127
        %v875 = vpop.permute.xlu0 %874
        %876 = vrot.lane.b32.xlu0 %v854, 127
        %v877 = vpop.permute.xlu0 %876
        %878 = vrot.lane.b32.xlu0 %v855, 127
        %v879 = vpop.permute.xlu0 %878
        %v888 = vmax.f32 %v799, %v865
        %v889 = vmax.f32 %v800, %v867
        %v890 = vmax.f32 %v801, %v869
        %v891 = vmax.f32 %v802, %v871
        %v892 = vmax.f32 %v803, %v873
        %v893 = vmax.f32 %v804, %v875
        %v894 = vmax.f32 %v805, %v877
        %v895 = vmax.f32 %v806, %v879
        %s896 = scalar_lea.vmem %s199, 32
        %v897 = vld [vmem:[%s896] sm:$0x1]
        %v898 = vld [vmem:[%s896 + $0x1] sm:$0x1]
        %v899 = vld [vmem:[%s896 + $0x2] sm:$0x1]
        %v900 = vld [vmem:[%s896 + $0x3] sm:$0x1]
        %v905 = vlaneseq
        %v906 = vshrl.u32 %v905, 7
        %v907 = vsub.s32 0, %v906
        %v908 = vrot.slane %v897, %v907
        %v909 = vlaneseq
        %v910 = vshrl.u32 %v909, 7
        %v911 = vsub.s32 0, %v910
        %v912 = vrot.slane %v898, %v911
        %v913 = vlaneseq
        %v914 = vshrl.u32 %v913, 7
        %v915 = vsub.s32 0, %v914
        %v916 = vrot.slane %v899, %v915
        %v917 = vlaneseq
        %v918 = vshrl.u32 %v917, 7
        %v919 = vsub.s32 0, %v918
        %v920 = vrot.slane %v900, %v919
        %921 = vset.pattern.permute.xlu0 0
        %922 = vperm.xlu0 %921, %v908
        %v923 = vpop.permute.xlu0 %922
        %925 = vset.pattern.permute.xlu0 0
        %926 = vperm.xlu0 %925, %v912
        %v927 = vpop.permute.xlu0 %926
        %929 = vset.pattern.permute.xlu0 0
        %930 = vperm.xlu0 %929, %v916
        %v931 = vpop.permute.xlu0 %930
        %933 = vset.pattern.permute.xlu0 0
        %934 = vperm.xlu0 %933, %v920
        %v935 = vpop.permute.xlu0 %934
        %v937 = vadd.f32 %v742, %v923
        %v938 = vadd.f32 %v743, %v923
        %v939 = vadd.f32 %v744, %v927
        %v940 = vadd.f32 %v745, %v927
        %v941 = vadd.f32 %v746, %v931
        %v942 = vadd.f32 %v747, %v931
        %v943 = vadd.f32 %v748, %v935
        %v944 = vadd.f32 %v749, %v935
        %953 = vrot.lane.b32.xlu0 %v937, 126
        %v954 = vpop.permute.xlu0 %953
        %955 = vrot.lane.b32.xlu0 %v938, 126
        %v956 = vpop.permute.xlu0 %955
        %957 = vrot.lane.b32.xlu0 %v939, 126
        %v958 = vpop.permute.xlu0 %957
        %959 = vrot.lane.b32.xlu0 %v940, 126
        %v960 = vpop.permute.xlu0 %959
        %961 = vrot.lane.b32.xlu0 %v941, 126
        %v962 = vpop.permute.xlu0 %961
        %963 = vrot.lane.b32.xlu0 %v942, 126
        %v964 = vpop.permute.xlu0 %963
        %965 = vrot.lane.b32.xlu0 %v943, 126
        %v966 = vpop.permute.xlu0 %965
        %967 = vrot.lane.b32.xlu0 %v944, 126
        %v968 = vpop.permute.xlu0 %967
        %v977 = vmax.f32 %v888, %v954
        %v978 = vmax.f32 %v889, %v956
        %v979 = vmax.f32 %v890, %v958
        %v980 = vmax.f32 %v891, %v960
        %v981 = vmax.f32 %v892, %v962
        %v982 = vmax.f32 %v893, %v964
        %v983 = vmax.f32 %v894, %v966
        %v984 = vmax.f32 %v895, %v968
        %vm985 = vcmask 130048
        %986 = vst.msk [vmem:[%s194] sm:$0xff] %vm985, %v977
        %987 = vst.msk [vmem:[%s194 + $0x8] sm:$0xff] %vm985, %v978
        %988 = vst.msk [vmem:[%s194 + $0x10] sm:$0xff] %vm985, %v979
        %989 = vst.msk [vmem:[%s194 + $0x18] sm:$0xff] %vm985, %v980
        %990 = vst.msk [vmem:[%s194 + $0x20] sm:$0xff] %vm985, %v981
        %991 = vst.msk [vmem:[%s194 + $0x28] sm:$0xff] %vm985, %v982
        %992 = vst.msk [vmem:[%s194 + $0x30] sm:$0xff] %vm985, %v983
        %993 = vst.msk [vmem:[%s194 + $0x38] sm:$0xff] %vm985, %v984
        %s994 = sand.u32 %s95, 1
        %s995 = scalar_lea.sflag [#allocation5], %s994
        %s996 = sand.u32 %s95, 1
        %s997 = smul.addr %s996, 64
        %s998 = scalar_lea.vmem [#allocation6], %s997
        // Predicated region
        $region33: #{tpu_custom_call.1} parent=27 // pred_check
          %p999 = pneg %p105
        $region34: #{tpu_custom_call.1} parent=27 // pred_check_branch
          %1001 = sbr.rel (%p999) target = $region36
        $region35: #{tpu_custom_call.1} parent=27 // pred_region
          %s1002 = smul.u32 4, %s24
          %s1004 = ssub.s32 1024, 1024
          %1005 = vsyncadd %s995, %s1004
          %s1006 = smul.addr %s1002, 2
          %s1007 = smul.addr %s23, 8
          %s1008 = sadd.s32 %s1006, %s1007
          %s1009 = smul.addr %s1008, 128
          %s1010 = scalar_lea.hbm %s2, %s1009
          %s1011 = sshll.u32 %s998, 4
          %s1012 = int_to_ptr.vmem [resolvable:$true] %s1011
          %1017 = dma.vmem_to_hbm [thread:$0]  %s1012, 1024, %s1010, %s995, 128, 128, 8
        $region36: #{tpu_custom_call.1} parent=27 // pred_fallthru
          _
      $region28: #{tpu_custom_call.1} parent=5 // pred_fallthru
        _
      %p1018 = scmp.le.s32.totalorder 2, %s14
      // Predicated region
      $region37: #{tpu_custom_call.1} parent=5 // pred_check
        %p1019 = pneg %p1018
      $region38: #{tpu_custom_call.1} parent=5 // pred_check_branch
        %1021 = sbr.rel (%p1019) target = $region40
      $region39: #{tpu_custom_call.1} parent=5 // pred_region
        %s1022 = ssub.s32 %s14, 2
        // Predicated region
        $region41: #{tpu_custom_call.1} parent=39 // pred_check
          %p1023 = pneg %p111
        $region42: #{tpu_custom_call.1} parent=39 // pred_check_branch
          %1025 = sbr.rel (%p1023) target = $region44
        $region43: #{tpu_custom_call.1} parent=39 // pred_region
          %s1026 = sand.u32 %s96, 1
          %s1027 = scalar_lea.sflag [#allocation5], %s1026
          %s1028 = sand.u32 %s96, 1
          %s1029 = smul.addr %s1028, 64
          %s1030 = scalar_lea.vmem [#allocation6], %s1029
          %1031 = dma.done %s1027, 1024
        $region44: #{tpu_custom_call.1} parent=39 // pred_fallthru
          _
      $region40: #{tpu_custom_call.1} parent=5 // pred_fallthru
        _
    $region6: #{tpu_custom_call.1} parent=1 // loop_footer
      %s18 = sadd.s32 1, %s14
    $region7: #{tpu_custom_call.1} parent=1 // loop_footer_branch
      %13 = sbr.rel target = $region3
    $region8: #{tpu_custom_call.1} parent=1 // loop_exit
      _
    %1032 = vsyncpa [#allocation4], 1
    %s1033 = scalar_lea.sflag [#allocation4], 1
    %1034 = vsyncpa %s1033, 1
    %1035 = vsyncpa [#allocation5], 1
    %s1036 = scalar_lea.sflag [#allocation5], 1
    %1037 = vsyncpa %s1036, 1

</llo_original>
